<compile_context>
chip_gen: v7x
topology: tpu7x:2x2x1
jax: 0.10.0
libtpu: 0.0.40
codegen_flags: <defaults>
</compile_context>

<pallas_src>
import math
import functools

import numpy as np
import jax
import jax.numpy as jnp
from jax.experimental import pallas as pl
from jax.experimental.pallas import tpu as pltpu

EPS = 1e-5                        # BatchNorm2d default eps
_VMEM_BUDGET = 24 * 1024 * 1024   # conservative: fits v7x's 64 MiB VMEM w/ headroom
_VMEM_LIMIT = 32 * 1024 * 1024    # raise toward 64-96 MiB on v5e/v6e for big shapes


def _skip_conv_bn_relu_kernel(mask_ref, xpf_ref, wm_ref, bn_ref, out_ref,
                              acc_ref, *cache_refs, Kh, Kw, Ph, Pw, Wpad, L,
                              Bn, count):
    """Two-pass kernel over grid (pass, sample_block).

    pass 0: conv for Bn samples as ONE im2col MXU matmul + fused per-channel
            sum / sum-of-squares accumulation for both branches (global BN
            stats) into a (C, 4) VMEM scratch; conv / skip tiles optionally
            cached in VMEM.
    pass 1: read (or recompute) the tiles, apply both BatchNorms + 1/sqrt(2)
            as one folded per-channel scale/shift FMA, ReLU, lane-dense store.

    Layout: the zero-padded input arrives width-flattened as (Bn, C, Lx) with
    row width Wpad, so every im2col tap and the skip branch are contiguous
    lane slices.  Output lives on the wide grid of L = H*Wpad lanes/sample
    (L % 128 == 0); junk columns are masked out of the statistics and sliced
    off by the wrapper.
    """
    p = pl.program_id(0)           # 0 = statistics pass, 1 = apply pass
    nb = pl.program_id(1)          # sample-block index
    cached = len(cache_refs) == 2
    inv_r2 = 1.0 / math.sqrt(2.0)

    def conv_and_skip():
        xpf = xpf_ref[...]                                   # (Bn, C, Lx)
        # im2col: patches[(kh*Kw+kw)*C + c, s*L + q] = xpad[s, c, q//Wpad + kh,
        # q%Wpad + kw]; every tap is a contiguous lane slice.
        taps = []
        for kh in range(Kh):
            for kw in range(Kw):
                off = kh * Wpad + kw
                taps.append(jnp.concatenate(
                    [xpf[s, :, off:off + L] for s in range(Bn)], axis=1))
        patches = jnp.concatenate(taps, axis=0)              # (Kh*Kw*C, Bn*L)
        wm = wm_ref[...]
        conv = jnp.dot(wm, patches.astype(wm.dtype),
                       preferred_element_type=jnp.float32)   # (C_out, Bn*L)
        # NOTE: conv bias intentionally omitted — cancels under training BN.
        off = Ph * Wpad + Pw
        x_skip = jnp.concatenate(
            [xpf[s, :, off:off + L] for s in range(Bn)],
            axis=1).astype(jnp.float32)                      # (C, Bn*L)
        return conv, x_skip

    @pl.when((p == 0) & (nb == 0))
    def _init():
        acc_ref[...] = jnp.zeros_like(acc_ref)

    @pl.when(p == 0)
    def _stats():
        conv, x_skip = conv_and_skip()
        if cached:
            cache_refs[0][...] = conv
            cache_refs[1][...] = x_skip
        # junk lanes of conv (taps wrap across rows) must be masked out of the
        # stats; junk lanes of x_skip are padding zeros, so no mask needed.
        valid = mask_ref[...]                                # (1, Bn*L) {0,1}
        cm = conv * valid
        acc_ref[...] += jnp.concatenate(
            [jnp.sum(cm, axis=1, keepdims=True),             # sum  conv
             jnp.sum(cm * conv, axis=1, keepdims=True),      # sum  conv^2
             jnp.sum(x_skip, axis=1, keepdims=True),         # sum  x
             jnp.sum(x_skip * x_skip, axis=1, keepdims=True)],
            axis=1)                                          # one (C, 4) RMW

    @pl.when(p == 1)
    def _apply():
        if cached:
            conv = cache_refs[0][...]
            x_skip = cache_refs[1][...]
        else:
            conv, x_skip = conv_and_skip()
        inv_n = 1.0 / count
        mean_c = acc_ref[:, 0:1] * inv_n
        var_c = acc_ref[:, 1:2] * inv_n - mean_c * mean_c    # biased variance
        mean_s = acc_ref[:, 2:3] * inv_n
        var_s = acc_ref[:, 3:4] * inv_n - mean_s * mean_s
        g_c, b_c = bn_ref[:, 0:1], bn_ref[:, 1:2]            # (C, 1) each
        g_s, b_s = bn_ref[:, 2:3], bn_ref[:, 3:4]
        # fold BN + 1/sqrt(2) into one scale/shift per channel per branch
        scale_c = g_c * jax.lax.rsqrt(var_c + EPS) * inv_r2
        shift_c = b_c * inv_r2 - mean_c * scale_c
        scale_s = g_s * jax.lax.rsqrt(var_s + EPS) * inv_r2
        shift_s = b_s * inv_r2 - mean_s * scale_s
        y = conv * scale_c + x_skip * scale_s + (shift_c + shift_s)
        y = jnp.maximum(y, 0.0).astype(out_ref.dtype)        # ReLU
        for s in range(Bn):                                  # lane-aligned stores
            out_ref[s] = y[:, s * L:(s + 1) * L]


def skip_conv_norm_acti_2d(x, w, b, gamma_conv, beta_conv, gamma_skip,
                           beta_skip, *, padding, mxu_dtype=jnp.float32):
    """Fused SkipConvNormActi forward (training-mode BN, stride=1,
    in_channels == out_channels so the skip branch is active).

    x: (N, C, H, W); w: (C, C, Kh, Kw); b / gammas / betas: (C,).
    padding = (Ph, Pw) with Kh == 2*Ph+1, Kw == 2*Pw+1 ('same' output).
    mxu_dtype: cast matmul operands only (use jnp.bfloat16 on v6e/v7x for ~3x
    MXU throughput; default f32 keeps exact parity and v5e behavior).
    """
    N, C, H, W = x.shape
    C_out, C_in, Kh, Kw = w.shape
    Ph, Pw = padding
    assert C_in == C and C_out == C, "skip branch requires in == out channels"
    assert Kh == 2 * Ph + 1 and Kw == 2 * Pw + 1, "skip add requires 'same' output"
    del b   # conv bias cancels under training-mode BatchNorm -> never shipped

    # ---- wide lane layout: L = H*Wpad, lane-aligned to 128 when cheap -------
    Wp0 = W + 2 * Pw
    Wpad = Wp0
    while (H * Wpad) % 128 and Wpad < 2 * Wp0:
        Wpad += 1
    if (H * Wpad) % 128:
        Wpad = Wp0          # alignment would cost too many junk columns
    Hp = H + 2 * Ph
    L = H * Wpad            # wide-flattened spatial extent per sample
    Lx = (Hp + 1) * Wpad    # +1 zero row keeps every tap's length-L slice in bounds

    # ---- samples per grid step: largest divisor of N whose step fits VMEM ---
    def step_bytes(bn_):
        lanes = bn_ * L
        return 4 * (2 * bn_ * C * Lx          # double-buffered input block
                    + 2 * bn_ * C_out * L     # double-buffered output block
                    + 2 * lanes               # mask
                    + 2 * Kh * Kw * C * lanes # im2col taps + concatenated patches
                    + 2 * C_out * lanes)      # conv + skip tiles

    Bn = 1
    for cand in range(N, 0, -1):
        if N % cand == 0 and step_bytes(cand) <= _VMEM_BUDGET:
            Bn = cand
            break
    n_blk = N // Bn
    cache_bytes = 4 * 2 * C_out * Bn * L
    # cache conv/skip tiles (and keep xpf resident) when the whole batch fits
    # in a single block; otherwise fall back to re-fetch + recompute in pass 1.
    use_cache = (n_blk == 1) and (step_bytes(Bn) + cache_bytes <= _VMEM_BUDGET)

    # nn.ZeroPad2d + width pad to Wpad + flatten (H, W) -> lane axis; x is
    # shipped to the kernel ONCE (conv taps and skip branch both slice it).
    xpf = jnp.pad(x, ((0, 0), (0, 0), (Ph, Ph + 1),
                      (Pw, Wpad - W - Pw))).reshape(N, C, Lx)

    # weights -> (C_out, Kh*Kw*C_in), tap-major, matching the im2col concat
    wm = jnp.transpose(w, (0, 2, 3, 1)).reshape(C_out, Kh * Kw * C_in)
    wm = wm.astype(mxu_dtype)

    # BN affine parameters packed as one (C, 4) array
    bn_params = jnp.stack([gamma_conv, beta_conv, gamma_skip, beta_skip],
                          axis=1).astype(jnp.float32)

    # grid-invariant validity mask ((q mod Wpad) < W), precomputed host-side
    mask = jnp.asarray(
        np.tile((np.arange(L) % Wpad < W).astype(np.float32), Bn)[None, :])

    kernel = functools.partial(_skip_conv_bn_relu_kernel, Kh=Kh, Kw=Kw, Ph=Ph,
                               Pw=Pw, Wpad=Wpad, L=L, Bn=Bn, count=N * H * W)

    if use_cache:
        xpf_map = lambda p, nb: (0, 0, 0)      # single block stays resident: 1 DMA
    else:
        xpf_map = lambda p, nb: (nb, 0, 0)     # re-fetched in pass 1 (recompute path)

    scratch = [pltpu.VMEM((C_out, 4), jnp.float32)]
    if use_cache:
        scratch += [pltpu.VMEM((C_out, Bn * L), jnp.float32),
                    pltpu.VMEM((C, Bn * L), jnp.float32)]

    out_wide = pl.pallas_call(
        kernel,
        grid=(2, n_blk),                       # (pass, sample-block)
        in_specs=[
            pl.BlockSpec((1, Bn * L), lambda p, nb: (0, 0)),
            pl.BlockSpec((Bn, C, Lx), xpf_map),
            pl.BlockSpec((C_out, Kh * Kw * C_in), lambda p, nb: (0, 0)),
            pl.BlockSpec((C_out, 4), lambda p, nb: (0, 0)),
        ],
        # all pass-0 iterations pin output block 0 (never flushed until pass 1
        # overwrites it) -> each output block is DMA'd to HBM exactly once.
        out_specs=pl.BlockSpec((Bn, C_out, L), lambda p, nb: (p * nb, 0, 0)),
        out_shape=jax.ShapeDtypeStruct((N, C_out, L), x.dtype),
        scratch_shapes=scratch,
        compiler_params=pltpu.CompilerParams(
            # Both axes stay sequential ("arbitrary"): the VMEM scratch carries
            # *global* batch-norm statistics (and the cached tiles) across the
            # whole grid, so no axis can be megacore-parallel without a
            # cross-core reduction.
            dimension_semantics=("arbitrary", "arbitrary"),
            vmem_limit_bytes=_VMEM_LIMIT,
        ),
    )(mask, xpf, wm, bn_params)

    # un-flatten the wide layout (free contiguous reshape) and drop the junk
    # columns (one slice; fuses into the consumer downstream).
    return out_wide.reshape(N, C_out, H, Wpad)[:, :, :, :W]


def _ref_forward(x, w, b, gc, bc, gs, bs, *, padding):
    """Plain-JAX reference matching the PyTorch forward (training-mode BN2d)."""
    Ph, Pw = padding
    xpad = jnp.pad(x, ((0, 0), (0, 0), (Ph, Ph), (Pw, Pw)))      # nn.ZeroPad2d
    conv = jax.lax.conv_general_dilated(
        xpad, w, window_strides=(1, 1), padding='VALID',
        dimension_numbers=('NCHW', 'OIHW', 'NCHW')) + b[None, :, None, None]

    def bn(v, g, be):
        m = jnp.mean(v, axis=(0, 2, 3), keepdims=True)
        var = jnp.mean((v - m) ** 2, axis=(0, 2, 3), keepdims=True)
        return (g[None, :, None, None] * (v - m) * jax.lax.rsqrt(var + EPS)
                + be[None, :, None, None])

    return jax.nn.relu((bn(conv, gc, bc) + bn(x, gs, bs)) / math.sqrt(2.0))


if __name__ == "__main__":
    N, C, H, W = 2, 8, 16, 16

    key = jax.random.PRNGKey(0)
    kx, kwt, kb, k1, k2, k3, k4 = jax.random.split(key, 7)
    x = jax.random.normal(kx, (N, C, H, W), dtype=jnp.float32)
    b = 0.1 * jax.random.normal(kb, (C,), dtype=jnp.float32)
    gamma_conv = 1.0 + 0.1 * jax.random.normal(k1, (C,), dtype=jnp.float32)
    beta_conv = 0.1 * jax.random.normal(k2, (C,), dtype=jnp.float32)
    gamma_skip = 1.0 + 0.1 * jax.random.normal(k3, (C,), dtype=jnp.float32)
    beta_skip = 0.1 * jax.random.normal(k4, (C,), dtype=jnp.float32)

    # the two conv geometries RepVGG_2D (hilbert variant) alternates between:
    # the base (3,3)/pad(1,1) block and the alternate (1,3)/pad(0,1) block.
    for (Kh, Kw), (Ph, Pw) in (((3, 3), (1, 1)), ((1, 3), (0, 1))):
        w = 0.2 * jax.random.normal(kwt, (C, C, Kh, Kw), dtype=jnp.float32)

        out = skip_conv_norm_acti_2d(x, w, b, gamma_conv, beta_conv,
                                     gamma_skip, beta_skip, padding=(Ph, Pw))
        out = jax.block_until_ready(out)

        ref = _ref_forward(x, w, b, gamma_conv, beta_conv, gamma_skip,
                           beta_skip, padding=(Ph, Pw))
        ref = jax.block_until_ready(ref)

        assert out.shape == (N, C, H, W), out.shape
        err = float(np.max(np.abs(np.asarray(out) - np.asarray(ref))))
        assert np.allclose(np.asarray(out), np.asarray(ref),
                           atol=1e-4, rtol=1e-4), err

    print("KERNEL_OK")
</pallas_src>

<mosaic_0001>
module attributes {stable_mosaic.version = 11 : i64} {
  func.func @_skip_conv_bn_relu_kernel(%arg0: i32, %arg1: i32, %arg2: memref<1x768xf32, #tpu.memory_space<vmem>>, %arg3: memref<2x8x456xf32, #tpu.memory_space<vmem>>, %arg4: memref<8x72xf32, #tpu.memory_space<vmem>>, %arg5: memref<8x4xf32, #tpu.memory_space<vmem>>, %arg6: memref<2x8x384xf32, #tpu.memory_space<vmem>>, %arg7: memref<8x4xf32, #tpu.memory_space<vmem>>, %arg8: memref<8x768xf32, #tpu.memory_space<vmem>>, %arg9: memref<8x768xf32, #tpu.memory_space<vmem>>) attributes {dimension_semantics = [#tpu.dimension_semantics<arbitrary>, #tpu.dimension_semantics<arbitrary>], iteration_bounds = array<i64: 2, 1>, scalar_prefetch = 0 : i64, scratch_operands = 3 : i64, tpu.core_type = #tpu.core_type<tc>, window_params = [{pipeline_mode = #tpu.pipeline_mode<synchronous>, transform_indices = @transform_0, window_bounds = array<i64: 1, 768>}, {pipeline_mode = #tpu.pipeline_mode<synchronous>, transform_indices = @transform_1, window_bounds = array<i64: 2, 8, 456>}, {pipeline_mode = #tpu.pipeline_mode<synchronous>, transform_indices = @transform_2, window_bounds = array<i64: 8, 72>}, {pipeline_mode = #tpu.pipeline_mode<synchronous>, transform_indices = @transform_3, window_bounds = array<i64: 8, 4>}, {transform_indices = @transform_4, window_bounds = array<i64: 2, 8, 384>}]} {
    %c0_i32 = arith.constant 0 : i32
    %0 = arith.cmpi eq, %arg0, %c0_i32 : i32
    %c0_i32_0 = arith.constant 0 : i32
    %1 = arith.cmpi eq, %arg1, %c0_i32_0 : i32
    %2 = arith.andi %0, %1 : i1
    %3 = arith.extui %2 : i1 to i32
    %c0_i32_1 = arith.constant 0 : i32
    %4 = arith.cmpi ne, %3, %c0_i32_1 : i32
    scf.if %4 {
      %cst = arith.constant 0.000000e+00 : f32
      %11 = vector.broadcast %cst : f32 to vector<8x4xf32>
      %c0 = arith.constant 0 : index
      %c0_5 = arith.constant 0 : index
      %12 = vector.load %arg7[%c0, %c0_5] : memref<8x4xf32, #tpu.memory_space<vmem>>, vector<8x4xf32>
      tpu.vector_store %arg7[%c0, %c0_5], %11 {strides = array<i32>} : memref<8x4xf32, #tpu.memory_space<vmem>>, vector<8x4xf32>,
    } else {
    }
    %c0_i32_2 = arith.constant 0 : i32
    %5 = arith.cmpi eq, %arg0, %c0_i32_2 : i32
    %6 = arith.extui %5 : i1 to i32
    %c0_i32_3 = arith.constant 0 : i32
    %7 = arith.cmpi ne, %6, %c0_i32_3 : i32
    scf.if %7 {
      %c0 = arith.constant 0 : index
      %c0_5 = arith.constant 0 : index
      %c0_6 = arith.constant 0 : index
      %11 = vector.load %arg3[%c0, %c0_5, %c0_6] : memref<2x8x456xf32, #tpu.memory_space<vmem>>, vector<2x8x456xf32>
      %12 = vector.extract_strided_slice %11 {offsets = [0, 0, 0], sizes = [1, 8, 384], strides = [1, 1, 1]} : vector<2x8x456xf32> to vector<1x8x384xf32>
      %13 = vector.shape_cast %12 : vector<1x8x384xf32> to vector<8x384xf32>
      %14 = vector.extract_strided_slice %11 {offsets = [1, 0, 0], sizes = [1, 8, 384], strides = [1, 1, 1]} : vector<2x8x456xf32> to vector<1x8x384xf32>
      %15 = vector.shape_cast %14 : vector<1x8x384xf32> to vector<8x384xf32>
      %16 = tpu.concatenate %13, %15 in 1 : vector<8x384xf32>, vector<8x384xf32> -> vector<8x768xf32>
      %17 = vector.extract_strided_slice %11 {offsets = [0, 0, 1], sizes = [1, 8, 384], strides = [1, 1, 1]} : vector<2x8x456xf32> to vector<1x8x384xf32>
      %18 = vector.shape_cast %17 : vector<1x8x384xf32> to vector<8x384xf32>
      %19 = vector.extract_strided_slice %11 {offsets = [1, 0, 1], sizes = [1, 8, 384], strides = [1, 1, 1]} : vector<2x8x456xf32> to vector<1x8x384xf32>
      %20 = vector.shape_cast %19 : vector<1x8x384xf32> to vector<8x384xf32>
      %21 = tpu.concatenate %18, %20 in 1 : vector<8x384xf32>, vector<8x384xf32> -> vector<8x768xf32>
      %22 = vector.extract_strided_slice %11 {offsets = [0, 0, 2], sizes = [1, 8, 384], strides = [1, 1, 1]} : vector<2x8x456xf32> to vector<1x8x384xf32>
      %23 = vector.shape_cast %22 : vector<1x8x384xf32> to vector<8x384xf32>
      %24 = vector.extract_strided_slice %11 {offsets = [1, 0, 2], sizes = [1, 8, 384], strides = [1, 1, 1]} : vector<2x8x456xf32> to vector<1x8x384xf32>
      %25 = vector.shape_cast %24 : vector<1x8x384xf32> to vector<8x384xf32>
      %26 = tpu.concatenate %23, %25 in 1 : vector<8x384xf32>, vector<8x384xf32> -> vector<8x768xf32>
      %27 = vector.extract_strided_slice %11 {offsets = [0, 0, 24], sizes = [1, 8, 384], strides = [1, 1, 1]} : vector<2x8x456xf32> to vector<1x8x384xf32>
      %28 = vector.shape_cast %27 : vector<1x8x384xf32> to vector<8x384xf32>
      %29 = vector.extract_strided_slice %11 {offsets = [1, 0, 24], sizes = [1, 8, 384], strides = [1, 1, 1]} : vector<2x8x456xf32> to vector<1x8x384xf32>
      %30 = vector.shape_cast %29 : vector<1x8x384xf32> to vector<8x384xf32>
      %31 = tpu.concatenate %28, %30 in 1 : vector<8x384xf32>, vector<8x384xf32> -> vector<8x768xf32>
      %32 = vector.extract_strided_slice %11 {offsets = [0, 0, 25], sizes = [1, 8, 384], strides = [1, 1, 1]} : vector<2x8x456xf32> to vector<1x8x384xf32>
      %33 = vector.shape_cast %32 : vector<1x8x384xf32> to vector<8x384xf32>
      %34 = vector.extract_strided_slice %11 {offsets = [1, 0, 25], sizes = [1, 8, 384], strides = [1, 1, 1]} : vector<2x8x456xf32> to vector<1x8x384xf32>
      %35 = vector.shape_cast %34 : vector<1x8x384xf32> to vector<8x384xf32>
      %36 = tpu.concatenate %33, %35 in 1 : vector<8x384xf32>, vector<8x384xf32> -> vector<8x768xf32>
      %37 = vector.extract_strided_slice %11 {offsets = [0, 0, 26], sizes = [1, 8, 384], strides = [1, 1, 1]} : vector<2x8x456xf32> to vector<1x8x384xf32>
      %38 = vector.shape_cast %37 : vector<1x8x384xf32> to vector<8x384xf32>
      %39 = vector.extract_strided_slice %11 {offsets = [1, 0, 26], sizes = [1, 8, 384], strides = [1, 1, 1]} : vector<2x8x456xf32> to vector<1x8x384xf32>
      %40 = vector.shape_cast %39 : vector<1x8x384xf32> to vector<8x384xf32>
      %41 = tpu.concatenate %38, %40 in 1 : vector<8x384xf32>, vector<8x384xf32> -> vector<8x768xf32>
      %42 = vector.extract_strided_slice %11 {offsets = [0, 0, 48], sizes = [1, 8, 384], strides = [1, 1, 1]} : vector<2x8x456xf32> to vector<1x8x384xf32>
      %43 = vector.shape_cast %42 : vector<1x8x384xf32> to vector<8x384xf32>
      %44 = vector.extract_strided_slice %11 {offsets = [1, 0, 48], sizes = [1, 8, 384], strides = [1, 1, 1]} : vector<2x8x456xf32> to vector<1x8x384xf32>
      %45 = vector.shape_cast %44 : vector<1x8x384xf32> to vector<8x384xf32>
      %46 = tpu.concatenate %43, %45 in 1 : vector<8x384xf32>, vector<8x384xf32> -> vector<8x768xf32>
      %47 = vector.extract_strided_slice %11 {offsets = [0, 0, 49], sizes = [1, 8, 384], strides = [1, 1, 1]} : vector<2x8x456xf32> to vector<1x8x384xf32>
      %48 = vector.shape_cast %47 : vector<1x8x384xf32> to vector<8x384xf32>
      %49 = vector.extract_strided_slice %11 {offsets = [1, 0, 49], sizes = [1, 8, 384], strides = [1, 1, 1]} : vector<2x8x456xf32> to vector<1x8x384xf32>
      %50 = vector.shape_cast %49 : vector<1x8x384xf32> to vector<8x384xf32>
      %51 = tpu.concatenate %48, %50 in 1 : vector<8x384xf32>, vector<8x384xf32> -> vector<8x768xf32>
      %52 = vector.extract_strided_slice %11 {offsets = [0, 0, 50], sizes = [1, 8, 384], strides = [1, 1, 1]} : vector<2x8x456xf32> to vector<1x8x384xf32>
      %53 = vector.shape_cast %52 : vector<1x8x384xf32> to vector<8x384xf32>
      %54 = vector.extract_strided_slice %11 {offsets = [1, 0, 50], sizes = [1, 8, 384], strides = [1, 1, 1]} : vector<2x8x456xf32> to vector<1x8x384xf32>
      %55 = vector.shape_cast %54 : vector<1x8x384xf32> to vector<8x384xf32>
      %56 = tpu.concatenate %53, %55 in 1 : vector<8x384xf32>, vector<8x384xf32> -> vector<8x768xf32>
      %57 = tpu.concatenate %16, %21, %26, %31, %36, %41, %46, %51, %56 in 0 : vector<8x768xf32>, vector<8x768xf32>, vector<8x768xf32>, vector<8x768xf32>, vector<8x768xf32>, vector<8x768xf32>, vector<8x768xf32>, vector<8x768xf32>, vector<8x768xf32> -> vector<72x768xf32>
      %c0_7 = arith.constant 0 : index
      %c0_8 = arith.constant 0 : index
      %58 = vector.load %arg4[%c0_7, %c0_8] : memref<8x72xf32, #tpu.memory_space<vmem>>, vector<8x72xf32>
      %cst = arith.constant dense<0.000000e+00> : vector<8x768xf32>
      %59 = tpu.matmul %58, %57, %cst {dimension_numbers = #tpu.dot_dimension_numbers<[1], [0], [0], [1], [0, 0, 1, 1], [], []>} : vector<8x72xf32>, vector<72x768xf32>, vector<8x768xf32> -> vector<8x768xf32>
      %60 = vector.extract_strided_slice %11 {offsets = [0, 0, 25], sizes = [1, 8, 384], strides = [1, 1, 1]} : vector<2x8x456xf32> to vector<1x8x384xf32>
      %61 = vector.shape_cast %60 : vector<1x8x384xf32> to vector<8x384xf32>
      %62 = vector.extract_strided_slice %11 {offsets = [1, 0, 25], sizes = [1, 8, 384], strides = [1, 1, 1]} : vector<2x8x456xf32> to vector<1x8x384xf32>
      %63 = vector.shape_cast %62 : vector<1x8x384xf32> to vector<8x384xf32>
      %64 = tpu.concatenate %61, %63 in 1 : vector<8x384xf32>, vector<8x384xf32> -> vector<8x768xf32>
      %c0_9 = arith.constant 0 : index
      %c0_10 = arith.constant 0 : index
      %65 = vector.load %arg8[%c0_9, %c0_10] : memref<8x768xf32, #tpu.memory_space<vmem>>, vector<8x768xf32>
      tpu.vector_store %arg8[%c0_9, %c0_10], %59 {strides = array<i32>} : memref<8x768xf32, #tpu.memory_space<vmem>>, vector<8x768xf32>,
      %c0_11 = arith.constant 0 : index
      %c0_12 = arith.constant 0 : index
      %66 = vector.load %arg9[%c0_11, %c0_12] : memref<8x768xf32, #tpu.memory_space<vmem>>, vector<8x768xf32>
      tpu.vector_store %arg9[%c0_11, %c0_12], %64 {strides = array<i32>} : memref<8x768xf32, #tpu.memory_space<vmem>>, vector<8x768xf32>,
      %c0_13 = arith.constant 0 : index
      %c0_14 = arith.constant 0 : index
      %67 = vector.load %arg2[%c0_13, %c0_14] : memref<1x768xf32, #tpu.memory_space<vmem>>, vector<1x768xf32>
      %68 = vector.broadcast %67 : vector<1x768xf32> to vector<8x768xf32>
      %69 = arith.mulf %59, %68 : vector<8x768xf32>
      %c0_15 = arith.constant 0 : index
      %c0_16 = arith.constant 0 : index
      %70 = vector.load %arg7[%c0_15, %c0_16] : memref<8x4xf32, #tpu.memory_space<vmem>>, vector<8x4xf32>
      %cst_17 = arith.constant dense<0.000000e+00> : vector<8xf32>
      %71 = vector.multi_reduction <add>, %69, %cst_17 [1] : vector<8x768xf32> to vector<8xf32>
      %72 = vector.shape_cast %71 : vector<8xf32> to vector<8x1xf32>
      %73 = arith.mulf %69, %59 : vector<8x768xf32>
      %cst_18 = arith.constant dense<0.000000e+00> : vector<8xf32>
      %74 = vector.multi_reduction <add>, %73, %cst_18 [1] : vector<8x768xf32> to vector<8xf32>
      %75 = vector.shape_cast %74 : vector<8xf32> to vector<8x1xf32>
      %cst_19 = arith.constant dense<0.000000e+00> : vector<8xf32>
      %76 = vector.multi_reduction <add>, %64, %cst_19 [1] : vector<8x768xf32> to vector<8xf32>
      %77 = vector.shape_cast %76 : vector<8xf32> to vector<8x1xf32>
      %78 = arith.mulf %64, %64 : vector<8x768xf32>
      %cst_20 = arith.constant dense<0.000000e+00> : vector<8xf32>
      %79 = vector.multi_reduction <add>, %78, %cst_20 [1] : vector<8x768xf32> to vector<8xf32>
      %80 = vector.shape_cast %79 : vector<8xf32> to vector<8x1xf32>
      %81 = tpu.concatenate %72, %75, %77, %80 in 1 : vector<8x1xf32>, vector<8x1xf32>, vector<8x1xf32>, vector<8x1xf32> -> vector<8x4xf32>
      %82 = arith.addf %70, %81 : vector<8x4xf32>
      %c0_21 = arith.constant 0 : index
      %c0_22 = arith.constant 0 : index
      %83 = vector.load %arg7[%c0_21, %c0_22] : memref<8x4xf32, #tpu.memory_space<vmem>>, vector<8x4xf32>
      tpu.vector_store %arg7[%c0_21, %c0_22], %82 {strides = array<i32>} : memref<8x4xf32, #tpu.memory_space<vmem>>, vector<8x4xf32>,
    } else {
    }
    %c1_i32 = arith.constant 1 : i32
    %8 = arith.cmpi eq, %arg0, %c1_i32 : i32
    %9 = arith.extui %8 : i1 to i32
    %c0_i32_4 = arith.constant 0 : i32
    %10 = arith.cmpi ne, %9, %c0_i32_4 : i32
    scf.if %10 {
      %c0 = arith.constant 0 : index
      %c0_5 = arith.constant 0 : index
      %11 = vector.load %arg8[%c0, %c0_5] : memref<8x768xf32, #tpu.memory_space<vmem>>, vector<8x768xf32>
      %c0_6 = arith.constant 0 : index
      %c0_7 = arith.constant 0 : index
      %12 = vector.load %arg9[%c0_6, %c0_7] : memref<8x768xf32, #tpu.memory_space<vmem>>, vector<8x768xf32>
      %c0_8 = arith.constant 0 : index
      %c0_9 = arith.constant 0 : index
      %13 = vector.load %arg7[%c0_8, %c0_9] : memref<8x4xf32, #tpu.memory_space<vmem>>, vector<8x1xf32>
      %cst = arith.constant 0.001953125 : f32
      %14 = vector.broadcast %cst : f32 to vector<8x1xf32>
      %15 = arith.mulf %13, %14 : vector<8x1xf32>
      %c0_10 = arith.constant 0 : index
      %c1 = arith.constant 1 : index
      %16 = vector.load %arg7[%c0_10, %c1] : memref<8x4xf32, #tpu.memory_space<vmem>>, vector<8x1xf32>
      %cst_11 = arith.constant 0.001953125 : f32
      %17 = vector.broadcast %cst_11 : f32 to vector<8x1xf32>
      %18 = arith.mulf %16, %17 : vector<8x1xf32>
      %19 = arith.mulf %15, %15 : vector<8x1xf32>
      %20 = arith.subf %18, %19 : vector<8x1xf32>
      %c0_12 = arith.constant 0 : index
      %c2 = arith.constant 2 : index
      %21 = vector.load %arg7[%c0_12, %c2] : memref<8x4xf32, #tpu.memory_space<vmem>>, vector<8x1xf32>
      %cst_13 = arith.constant 0.001953125 : f32
      %22 = vector.broadcast %cst_13 : f32 to vector<8x1xf32>
      %23 = arith.mulf %21, %22 : vector<8x1xf32>
      %c0_14 = arith.constant 0 : index
      %c3 = arith.constant 3 : index
      %24 = vector.load %arg7[%c0_14, %c3] : memref<8x4xf32, #tpu.memory_space<vmem>>, vector<8x1xf32>
      %cst_15 = arith.constant 0.001953125 : f32
      %25 = vector.broadcast %cst_15 : f32 to vector<8x1xf32>
      %26 = arith.mulf %24, %25 : vector<8x1xf32>
      %27 = arith.mulf %23, %23 : vector<8x1xf32>
      %28 = arith.subf %26, %27 : vector<8x1xf32>
      %c0_16 = arith.constant 0 : index
      %c0_17 = arith.constant 0 : index
      %29 = vector.load %arg5[%c0_16, %c0_17] : memref<8x4xf32, #tpu.memory_space<vmem>>, vector<8x1xf32>
      %c0_18 = arith.constant 0 : index
      %c1_19 = arith.constant 1 : index
      %30 = vector.load %arg5[%c0_18, %c1_19] : memref<8x4xf32, #tpu.memory_space<vmem>>, vector<8x1xf32>
      %c0_20 = arith.constant 0 : index
      %c2_21 = arith.constant 2 : index
      %31 = vector.load %arg5[%c0_20, %c2_21] : memref<8x4xf32, #tpu.memory_space<vmem>>, vector<8x1xf32>
      %c0_22 = arith.constant 0 : index
      %c3_23 = arith.constant 3 : index
      %32 = vector.load %arg5[%c0_22, %c3_23] : memref<8x4xf32, #tpu.memory_space<vmem>>, vector<8x1xf32>
      %cst_24 = arith.constant 9.99999974E-6 : f32
      %33 = vector.broadcast %cst_24 : f32 to vector<8x1xf32>
      %34 = arith.addf %20, %33 : vector<8x1xf32>
      %35 = math.rsqrt %34 : vector<8x1xf32>
      %36 = arith.mulf %29, %35 : vector<8x1xf32>
      %cst_25 = arith.constant 0.707106769 : f32
      %37 = vector.broadcast %cst_25 : f32 to vector<8x1xf32>
      %38 = arith.mulf %36, %37 : vector<8x1xf32>
      %cst_26 = arith.constant 0.707106769 : f32
      %39 = vector.broadcast %cst_26 : f32 to vector<8x1xf32>
      %40 = arith.mulf %30, %39 : vector<8x1xf32>
      %41 = arith.mulf %15, %38 : vector<8x1xf32>
      %42 = arith.subf %40, %41 : vector<8x1xf32>
      %cst_27 = arith.constant 9.99999974E-6 : f32
      %43 = vector.broadcast %cst_27 : f32 to vector<8x1xf32>
      %44 = arith.addf %28, %43 : vector<8x1xf32>
      %45 = math.rsqrt %44 : vector<8x1xf32>
      %46 = arith.mulf %31, %45 : vector<8x1xf32>
      %cst_28 = arith.constant 0.707106769 : f32
      %47 = vector.broadcast %cst_28 : f32 to vector<8x1xf32>
      %48 = arith.mulf %46, %47 : vector<8x1xf32>
      %cst_29 = arith.constant 0.707106769 : f32
      %49 = vector.broadcast %cst_29 : f32 to vector<8x1xf32>
      %50 = arith.mulf %32, %49 : vector<8x1xf32>
      %51 = arith.mulf %23, %48 : vector<8x1xf32>
      %52 = arith.subf %50, %51 : vector<8x1xf32>
      %53 = vector.broadcast %38 : vector<8x1xf32> to vector<8x768xf32>
      %54 = arith.mulf %11, %53 : vector<8x768xf32>
      %55 = vector.broadcast %48 : vector<8x1xf32> to vector<8x768xf32>
      %56 = arith.mulf %12, %55 : vector<8x768xf32>
      %57 = arith.addf %54, %56 : vector<8x768xf32>
      %58 = arith.addf %42, %52 : vector<8x1xf32>
      %59 = vector.broadcast %58 : vector<8x1xf32> to vector<8x768xf32>
      %60 = arith.addf %57, %59 : vector<8x768xf32>
      %cst_30 = arith.constant 0.000000e+00 : f32
      %61 = vector.broadcast %cst_30 : f32 to vector<8x768xf32>
      %62 = arith.maximumf %60, %61 : vector<8x768xf32>
      %63 = vector.extract_strided_slice %62 {offsets = [0, 0], sizes = [8, 384], strides = [1, 1]} : vector<8x768xf32> to vector<8x384xf32>
      %c0_31 = arith.constant 0 : index
      %c0_32 = arith.constant 0 : index
      %c0_33 = arith.constant 0 : index
      %64 = vector.load %arg6[%c0_31, %c0_32, %c0_33] : memref<2x8x384xf32, #tpu.memory_space<vmem>>, vector<1x8x384xf32>
      %65 = vector.shape_cast %64 : vector<1x8x384xf32> to vector<8x384xf32>
      %66 = vector.shape_cast %63 : vector<8x384xf32> to vector<1x8x384xf32>
      tpu.vector_store %arg6[%c0_31, %c0_32, %c0_33], %66 {strides = array<i32>} : memref<2x8x384xf32, #tpu.memory_space<vmem>>, vector<1x8x384xf32>,
      %67 = vector.extract_strided_slice %62 {offsets = [0, 384], sizes = [8, 384], strides = [1, 1]} : vector<8x768xf32> to vector<8x384xf32>
      %c1_34 = arith.constant 1 : index
      %c0_35 = arith.constant 0 : index
      %c0_36 = arith.constant 0 : index
      %68 = vector.load %arg6[%c1_34, %c0_35, %c0_36] : memref<2x8x384xf32, #tpu.memory_space<vmem>>, vector<1x8x384xf32>
      %69 = vector.shape_cast %68 : vector<1x8x384xf32> to vector<8x384xf32>
      %70 = vector.shape_cast %67 : vector<8x384xf32> to vector<1x8x384xf32>
      tpu.vector_store %arg6[%c1_34, %c0_35, %c0_36], %70 {strides = array<i32>} : memref<2x8x384xf32, #tpu.memory_space<vmem>>, vector<1x8x384xf32>,
    } else {
    }
    return
  }
  func.func @transform_0(%arg0: i32, %arg1: i32) -> (i32, i32) {
    %c0_i32 = arith.constant 0 : i32
    %c0_i32_0 = arith.constant 0 : i32
    %c0_i32_1 = arith.constant 0 : i32
    return %c0_i32, %c0_i32_0 : i32, i32
  }
  func.func @transform_1(%arg0: i32, %arg1: i32) -> (i32, i32, i32) {
    %c0_i32 = arith.constant 0 : i32
    %c0_i32_0 = arith.constant 0 : i32
    %c0_i32_1 = arith.constant 0 : i32
    %c0_i32_2 = arith.constant 0 : i32
    return %c0_i32, %c0_i32_0, %c0_i32_1 : i32, i32, i32
  }
  func.func @transform_2(%arg0: i32, %arg1: i32) -> (i32, i32) {
    %c0_i32 = arith.constant 0 : i32
    %c0_i32_0 = arith.constant 0 : i32
    %c0_i32_1 = arith.constant 0 : i32
    return %c0_i32, %c0_i32_0 : i32, i32
  }
  func.func @transform_3(%arg0: i32, %arg1: i32) -> (i32, i32) {
    %c0_i32 = arith.constant 0 : i32
    %c0_i32_0 = arith.constant 0 : i32
    %c0_i32_1 = arith.constant 0 : i32
    return %c0_i32, %c0_i32_0 : i32, i32
  }
  func.func @transform_4(%arg0: i32, %arg1: i32) -> (i32, i32, i32) {
    %0 = arith.muli %arg0, %arg1 : i32
    %c0_i32 = arith.constant 0 : i32
    %c0_i32_0 = arith.constant 0 : i32
    %c0_i32_1 = arith.constant 0 : i32
    return %0, %c0_i32, %c0_i32_0 : i32, i32, i32
  }
}

</mosaic_0001>

<llo_original>
// kernel: tpu_custom_call.1
$region0: #{tpu_custom_call.1}
  #allocation0 [shape = 'u32[]', space=smem, size = 0x4, offset = 0x4, fixed_abs, tag = 'smem constant byte address 0x4 - core index']
  #allocation1 [shape = 'u32[144,128]{1,0:T(1,128)}', space=vmem, size = 0x12000, scoped, tag = 'internal scratch']
  #allocation2 [shape = 'f32[8,4]{1,0:T(8,128)}', space=vmem, size = 0x1000, scoped, tag = 'scratch operand']
  #allocation3 [shape = 'f32[8,768]{1,0:T(8,128)}', space=vmem, size = 0x6000, scoped, tag = 'scratch operand']
  #allocation4 [shape = 'f32[8,768]{1,0:T(8,128)}', space=vmem, size = 0x6000, scoped, tag = 'scratch operand']
  %s0 = inlined_call_operand.vmem [shape: f32[1,768], index: 0, kind: input, shape index: {}]
  %s1 = inlined_call_operand.hbm [shape: f32[2,8,456], index: 1, kind: input, shape index: {}]
  %s2 = inlined_call_operand.vmem [shape: f32[8,72], index: 2, kind: input, shape index: {}]
  %s3 = inlined_call_operand.vmem [shape: f32[8,4], index: 3, kind: input, shape index: {}]
  %s4 = inlined_call_operand.hbm [shape: f32[2,8,384], index: 4, kind: output, shape index: {}]
  %s5 = sld [smem:[#allocation0]]
  $region65: #{tpu_custom_call.1} parent=0
    _
  %s7 = ssub.s32 1, %s5
  %s8 = scalar_select 0, %s7, %s5
  $region1: #{tpu_custom_call.1} parent=0
    #allocation5 [shape = 'u8[32768]{0}', space=vmem, size = 0x8000, scoped, tag = 'input window, operand 1, single buffered']
    #allocation6 [shape = 's32[2]{0}', space=sflag, size = 0x8, scoped, tag = 'scoped memory for tpu_custom_call.1']
    #allocation7 [shape = 's32[2]{0}', space=sflag, size = 0x8, scoped, tag = 'scoped memory for tpu_custom_call.1']
    #allocation8 [shape = 'u8[49152]{0}', space=vmem, size = 0xc000, scoped, tag = 'output window, operand 0']
    %9 = vsyncpa [#allocation6], 0
    %10 = vsyncpa [#allocation7], 0
    %s11 = scalar_lea.sflag [#allocation7], 1
    %12 = vsyncpa %s11, 0
    loop: start=0, step=1, limit=4
    $region2: #{tpu_custom_call.1} parent=1 // loop_pre_header
      _
    $region3: #{tpu_custom_call.1} parent=1 // loop_header
      %s14 = sphi 0, %s18
      %p15 = scmp.ge.s32.totalorder %s14, 4
      %s21 = sphi 0, %s33
      %s22 = sphi 0, %s29
      %s23 = sphi 0, %s21
      %s24 = sphi 0, %s22
      %s25 = sphi 0, %s23
      %s26 = sphi 0, %s24
      %s34 = sphi 0, %s34
      %s36 = sphi 0, %s34
      %s37 = sphi 0, %s36
      %s51 = sphi 0, %s37
      %s55 = sphi 0, %s55
      %s57 = sphi 0, %s55
      %s58 = sphi 0, %s57
      %s72 = sphi 0, %s58
      %s76 = sphi 0, %s76
      %s78 = sphi 0, %s76
      %s79 = sphi 0, %s78
      %s93 = sphi 0, %s79
      %s97 = sphi 0, %s97
      %s99 = sphi 0, %s97
      %s100 = sphi 0, %s99
      %s114 = sphi 0, %s100
      %s122 = sphi 0, %s124
      %s125 = sphi 0, %s122
      %s126 = sphi 0, %s125
      %s142 = sphi 0, %s126
    $region4: #{tpu_custom_call.1} parent=1 // loop_header_branch
      %17 = sbr.rel (%p15) target = $region8
    $region5: #{tpu_custom_call.1} parent=1 // loop_body
      %s19 = ssub.s32 %s14, 1
      %s20 = ssub.s32 %s14, 2
      %s27 = sadd.s32 1, %s22
      %p28 = scmp.ge.s32.totalorder %s27, 1
      %s29 = scalar_select %p28, 0, %s27
      %s30 = sadd.s32 1, %s21
      %s31 = scalar_select %p28, %s30, %s21
      %p32 = scmp.ge.s32.totalorder %s31, 2
      %s33 = scalar_select %p32, 0, %s31
      %s35 = sadd.s32 %s34, 1
      %p38 = scmp.eq.s32.totalorder %s14, 1
      %p39 = scmp.ne.s32.totalorder %s34, %s36
      %p40 = scmp.eq.s32.totalorder %s14, 0
      %p41 = por %p39, %p40
      %p42 = scmp.ne.s32.totalorder %s34, %s36
      %p43 = scmp.eq.s32.totalorder %s19, 1
      %p44 = por %p42, %p43
      %p45 = scmp.ne.s32.totalorder %s36, %s37
      %p46 = scmp.eq.s32.totalorder %s19, 0
      %p47 = por %p45, %p46
      %p48 = scmp.ne.s32.totalorder %s36, %s37
      %p49 = scmp.eq.s32.totalorder %s20, 1
      %p50 = por %p48, %p49
      %p52 = scmp.ne.s32.totalorder %s37, %s51
      %p53 = scmp.eq.s32.totalorder %s20, 0
      %p54 = por %p52, %p53
      %s56 = sadd.s32 %s55, 1
      %p59 = scmp.eq.s32.totalorder %s14, 1
      %p60 = scmp.ne.s32.totalorder %s55, %s57
      %p61 = scmp.eq.s32.totalorder %s14, 0
      %p62 = por %p60, %p61
      %p63 = scmp.ne.s32.totalorder %s55, %s57
      %p64 = scmp.eq.s32.totalorder %s19, 1
      %p65 = por %p63, %p64
      %p66 = scmp.ne.s32.totalorder %s57, %s58
      %p67 = scmp.eq.s32.totalorder %s19, 0
      %p68 = por %p66, %p67
      %p69 = scmp.ne.s32.totalorder %s57, %s58
      %p70 = scmp.eq.s32.totalorder %s20, 1
      %p71 = por %p69, %p70
      %p73 = scmp.ne.s32.totalorder %s58, %s72
      %p74 = scmp.eq.s32.totalorder %s20, 0
      %p75 = por %p73, %p74
      %s77 = sadd.s32 %s76, 1
      %p80 = scmp.eq.s32.totalorder %s14, 1
      %p81 = scmp.ne.s32.totalorder %s76, %s78
      %p82 = scmp.eq.s32.totalorder %s14, 0
      %p83 = por %p81, %p82
      %p84 = scmp.ne.s32.totalorder %s76, %s78
      %p85 = scmp.eq.s32.totalorder %s19, 1
      %p86 = por %p84, %p85
      %p87 = scmp.ne.s32.totalorder %s78, %s79
      %p88 = scmp.eq.s32.totalorder %s19, 0
      %p89 = por %p87, %p88
      %p90 = scmp.ne.s32.totalorder %s78, %s79
      %p91 = scmp.eq.s32.totalorder %s20, 1
      %p92 = por %p90, %p91
      %p94 = scmp.ne.s32.totalorder %s79, %s93
      %p95 = scmp.eq.s32.totalorder %s20, 0
      %p96 = por %p94, %p95
      %s98 = sadd.s32 %s97, 1
      %p101 = scmp.eq.s32.totalorder %s14, 1
      %p102 = scmp.ne.s32.totalorder %s97, %s99
      %p103 = scmp.eq.s32.totalorder %s14, 0
      %p104 = por %p102, %p103
      %p105 = scmp.ne.s32.totalorder %s97, %s99
      %p106 = scmp.eq.s32.totalorder %s19, 1
      %p107 = por %p105, %p106
      %p108 = scmp.ne.s32.totalorder %s99, %s100
      %p109 = scmp.eq.s32.totalorder %s19, 0
      %p110 = por %p108, %p109
      %p111 = scmp.ne.s32.totalorder %s99, %s100
      %p112 = scmp.eq.s32.totalorder %s20, 1
      %p113 = por %p111, %p112
      %p115 = scmp.ne.s32.totalorder %s100, %s114
      %p116 = scmp.eq.s32.totalorder %s20, 0
      %p117 = por %p115, %p116
      %s118 = smul.u32 %s21, %s22
      %s119 = smul.u32 %s33, %s29
      %s120 = ssub.s32 %s118, %s119
      %p121 = scmp.eq.s32.totalorder %s120, 0
      %s123 = sadd.s32 %s122, 1
      %s124 = scalar_select %p121, %s122, %s123
      %p127 = pneg %p121
      %p128 = scmp.eq.s32.totalorder %s14, 1
      %p129 = por %p127, %p128
      %p130 = scmp.ne.s32.totalorder %s122, %s125
      %p131 = scmp.eq.s32.totalorder %s14, 0
      %p132 = por %p130, %p131
      %p133 = scmp.ne.s32.totalorder %s122, %s125
      %p134 = scmp.eq.s32.totalorder %s19, 1
      %p135 = por %p133, %p134
      %p136 = scmp.ne.s32.totalorder %s125, %s126
      %p137 = scmp.eq.s32.totalorder %s19, 0
      %p138 = por %p136, %p137
      %p139 = scmp.ne.s32.totalorder %s125, %s126
      %p140 = scmp.eq.s32.totalorder %s20, 1
      %p141 = por %p139, %p140
      %p143 = scmp.ne.s32.totalorder %s126, %s142
      %p144 = scmp.eq.s32.totalorder %s20, 0
      %p145 = por %p143, %p144
      %p146 = scmp.le.s32.totalorder 1, %s14
      %p147 = scmp.lt.s32.totalorder %s14, 3
      %p148 = pnand %p146, %p147
      %p149 = pneg %p148
      // Predicated region
      $region9: #{tpu_custom_call.1} parent=5 // pred_check
        _
      $region10: #{tpu_custom_call.1} parent=5 // pred_check_branch
        %151 = sbr.rel (%p148) target = $region12
      $region11: #{tpu_custom_call.1} parent=5 // pred_region
        %s152 = ssub.s32 %s14, 1
        // Predicated region
        $region13: #{tpu_custom_call.1} parent=11 // pred_check
          %p153 = pneg %p47
        $region14: #{tpu_custom_call.1} parent=11 // pred_check_branch
          %155 = sbr.rel (%p153) target = $region16
        $region15: #{tpu_custom_call.1} parent=11 // pred_region
          _
        $region16: #{tpu_custom_call.1} parent=11 // pred_fallthru
          _
        // Predicated region
        $region17: #{tpu_custom_call.1} parent=11 // pred_check
          %p156 = pneg %p68
        $region18: #{tpu_custom_call.1} parent=11 // pred_check_branch
          %158 = sbr.rel (%p156) target = $region20
        $region19: #{tpu_custom_call.1} parent=11 // pred_region
          %s160 = ssub.s32 1024, 1024
          %161 = vsyncadd [#allocation6], %s160
          %s162 = sshll.u32 [#allocation5], 4
          %s163 = int_to_ptr.vmem [resolvable:$true] %s162
          %168 = dma.hbm_to_vmem [thread:$0]  %s1, 1024, %s163, [#allocation6], 512, 512, 32
        $region20: #{tpu_custom_call.1} parent=11 // pred_fallthru
          _
        // Predicated region
        $region21: #{tpu_custom_call.1} parent=11 // pred_check
          %p169 = pneg %p89
        $region22: #{tpu_custom_call.1} parent=11 // pred_check_branch
          %171 = sbr.rel (%p169) target = $region24
        $region23: #{tpu_custom_call.1} parent=11 // pred_region
          _
        $region24: #{tpu_custom_call.1} parent=11 // pred_fallthru
          _
        // Predicated region
        $region25: #{tpu_custom_call.1} parent=11 // pred_check
          %p172 = pneg %p110
        $region26: #{tpu_custom_call.1} parent=11 // pred_check_branch
          %174 = sbr.rel (%p172) target = $region28
        $region27: #{tpu_custom_call.1} parent=11 // pred_region
          _
        $region28: #{tpu_custom_call.1} parent=11 // pred_fallthru
          _
      $region12: #{tpu_custom_call.1} parent=5 // pred_fallthru
        _
      %p175 = scmp.lt.s32.totalorder %s14, 2
      // Predicated region
      $region29: #{tpu_custom_call.1} parent=5 // pred_check
        %p176 = pneg %p175
      $region30: #{tpu_custom_call.1} parent=5 // pred_check_branch
        %178 = sbr.rel (%p176) target = $region32
      $region31: #{tpu_custom_call.1} parent=5 // pred_region
        _
      $region32: #{tpu_custom_call.1} parent=5 // pred_fallthru
        _
      %p179 = scmp.le.s32.totalorder 1, %s14
      %p180 = scmp.lt.s32.totalorder %s14, 3
      %p181 = pnand %p179, %p180
      %p182 = pneg %p181
      // Predicated region
      $region33: #{tpu_custom_call.1} parent=5 // pred_check
        _
      $region34: #{tpu_custom_call.1} parent=5 // pred_check_branch
        %184 = sbr.rel (%p181) target = $region36
      $region35: #{tpu_custom_call.1} parent=5 // pred_region
        %s185 = ssub.s32 %s14, 1
        // Predicated region
        $region37: #{tpu_custom_call.1} parent=35 // pred_check
          %p186 = pneg %p68
        $region38: #{tpu_custom_call.1} parent=35 // pred_check_branch
          %188 = sbr.rel (%p186) target = $region40
        $region39: #{tpu_custom_call.1} parent=35 // pred_region
          %189 = dma.done [#allocation6], 1024
        $region40: #{tpu_custom_call.1} parent=35 // pred_fallthru
          _
        %p190 = pneg %p47
        %p191 = pneg %p44
        %p192 = pneg %p68
        %p193 = pneg %p65
        %p194 = pneg %p89
        %p195 = pneg %p86
        %p196 = pneg %p110
        %p197 = pneg %p107
        %p198 = pneg %p138
        %p199 = pneg %p135
        %s200 = sand.u32 %s125, 1
        %s201 = scalar_lea.sflag [#allocation7], %s200
        %s202 = sand.u32 %s125, 1
        %s203 = smul.addr %s202, 48
        %s204 = scalar_lea.vmem [#allocation8], %s203
        %s205 = smul.u32 %s23, %s24
        %s206 = smul.u32 2, %s205
        %p207 = scmp.eq.s32.totalorder %s23, 0
        %p208 = scmp.eq.s32.totalorder %s24, 0
        %p209 = pnand %p207, %p208
        %p210 = pneg %p209
        // Predicated region
        $region41: #{tpu_custom_call.1} parent=35 // pred_check
          _
        $region42: #{tpu_custom_call.1} parent=35 // pred_check_branch
          %212 = sbr.rel (%p209) target = $region44
        $region43: #{tpu_custom_call.1} parent=35 // pred_region
          %vm213 = vcmask 31744
          %214 = vst.msk [vmem:[#allocation2] sm:$0xff] %vm213, 0.0
        $region44: #{tpu_custom_call.1} parent=35 // pred_fallthru
          _
        // Predicated region
        $region45: #{tpu_custom_call.1} parent=35 // pred_check
          %p215 = pneg %p207
        $region46: #{tpu_custom_call.1} parent=35 // pred_check_branch
          %217 = sbr.rel (%p215) target = $region48
        $region47: #{tpu_custom_call.1} parent=35 // pred_region
          %v218 = vld [vmem:[#allocation5] sm:$0xff]
          %v219 = vld [vmem:[#allocation5 + $0x8] sm:$0xff]
          %v220 = vld [vmem:[#allocation5 + $0x10] sm:$0xff]
          %v221 = vld [vmem:[#allocation5 + $0x18] sm:$0xff]
          %v222 = vld [vmem:[#allocation5 + $0x20] sm:$0xff]
          %v223 = vld [vmem:[#allocation5 + $0x28] sm:$0xff]
          %v224 = vld [vmem:[#allocation5 + $0x30] sm:$0xff]
          %v225 = vld [vmem:[#allocation5 + $0x38] sm:$0xff]
          %230 = vrot.lane.b32.xlu0 %v218, 127
          %v231 = vpop.permute.xlu0 %230
          %232 = vrot.lane.b32.xlu0 %v219, 127
          %v233 = vpop.permute.xlu0 %232
          %234 = vrot.lane.b32.xlu0 %v220, 127
          %v235 = vpop.permute.xlu0 %234
          %236 = vrot.lane.b32.xlu0 %v221, 127
          %v237 = vpop.permute.xlu0 %236
          %vm238 = vcmask 1039360
          %v239 = vsel %vm238, %v231, %v233
          %v240 = vsel %vm238, %v233, %v235
          %v241 = vsel %vm238, %v235, %v237
          %249 = vrot.lane.b32.xlu0 %v222, 127
          %v250 = vpop.permute.xlu0 %249
          %251 = vrot.lane.b32.xlu0 %v223, 127
          %v252 = vpop.permute.xlu0 %251
          %253 = vrot.lane.b32.xlu0 %v224, 127
          %v254 = vpop.permute.xlu0 %253
          %255 = vrot.lane.b32.xlu0 %v225, 127
          %v256 = vpop.permute.xlu0 %255
          %v257 = vsel %vm238, %v250, %v252
          %v258 = vsel %vm238, %v252, %v254
          %v259 = vsel %vm238, %v254, %v256
          %263 = vrot.lane.b32.xlu0 %v218, 126
          %v264 = vpop.permute.xlu0 %263
          %265 = vrot.lane.b32.xlu0 %v219, 126
          %v266 = vpop.permute.xlu0 %265
          %267 = vrot.lane.b32.xlu0 %v220, 126
          %v268 = vpop.permute.xlu0 %267
          %269 = vrot.lane.b32.xlu0 %v221, 126
          %v270 = vpop.permute.xlu0 %269
          %vm271 = vcmask 1031168
          %v272 = vsel %vm271, %v264, %v266
          %v273 = vsel %vm271, %v266, %v268
          %v274 = vsel %vm271, %v268, %v270
          %278 = vrot.lane.b32.xlu0 %v222, 126
          %v279 = vpop.permute.xlu0 %278
          %280 = vrot.lane.b32.xlu0 %v223, 126
          %v281 = vpop.permute.xlu0 %280
          %282 = vrot.lane.b32.xlu0 %v224, 126
          %v283 = vpop.permute.xlu0 %282
          %284 = vrot.lane.b32.xlu0 %v225, 126
          %v285 = vpop.permute.xlu0 %284
          %v286 = vsel %vm271, %v279, %v281
          %v287 = vsel %vm271, %v281, %v283
          %v288 = vsel %vm271, %v283, %v285
          %292 = vrot.lane.b32.xlu0 %v218, 104
          %v293 = vpop.permute.xlu0 %292
          %294 = vrot.lane.b32.xlu0 %v219, 104
          %v295 = vpop.permute.xlu0 %294
          %296 = vrot.lane.b32.xlu0 %v220, 104
          %v297 = vpop.permute.xlu0 %296
          %298 = vrot.lane.b32.xlu0 %v221, 104
          %v299 = vpop.permute.xlu0 %298
          %vm300 = vcmask 850944
          %v301 = vsel %vm300, %v293, %v295
          %v302 = vsel %vm300, %v295, %v297
          %v303 = vsel %vm300, %v297, %v299
          %307 = vrot.lane.b32.xlu0 %v222, 104
          %v308 = vpop.permute.xlu0 %307
          %309 = vrot.lane.b32.xlu0 %v223, 104
          %v310 = vpop.permute.xlu0 %309
          %311 = vrot.lane.b32.xlu0 %v224, 104
          %v312 = vpop.permute.xlu0 %311
          %313 = vrot.lane.b32.xlu0 %v225, 104
          %v314 = vpop.permute.xlu0 %313
          %v315 = vsel %vm300, %v308, %v310
          %v316 = vsel %vm300, %v310, %v312
          %v317 = vsel %vm300, %v312, %v314
          %321 = vrot.lane.b32.xlu0 %v218, 103
          %v322 = vpop.permute.xlu0 %321
          %323 = vrot.lane.b32.xlu0 %v219, 103
          %v324 = vpop.permute.xlu0 %323
          %325 = vrot.lane.b32.xlu0 %v220, 103
          %v326 = vpop.permute.xlu0 %325
          %327 = vrot.lane.b32.xlu0 %v221, 103
          %v328 = vpop.permute.xlu0 %327
          %vm329 = vcmask 842752
          %v330 = vsel %vm329, %v322, %v324
          %v331 = vsel %vm329, %v324, %v326
          %v332 = vsel %vm329, %v326, %v328
          %336 = vrot.lane.b32.xlu0 %v222, 103
          %v337 = vpop.permute.xlu0 %336
          %338 = vrot.lane.b32.xlu0 %v223, 103
          %v339 = vpop.permute.xlu0 %338
          %340 = vrot.lane.b32.xlu0 %v224, 103
          %v341 = vpop.permute.xlu0 %340
          %342 = vrot.lane.b32.xlu0 %v225, 103
          %v343 = vpop.permute.xlu0 %342
          %v344 = vsel %vm329, %v337, %v339
          %v345 = vsel %vm329, %v339, %v341
          %v346 = vsel %vm329, %v341, %v343
          %350 = vrot.lane.b32.xlu0 %v218, 102
          %v351 = vpop.permute.xlu0 %350
          %352 = vrot.lane.b32.xlu0 %v219, 102
          %v353 = vpop.permute.xlu0 %352
          %354 = vrot.lane.b32.xlu0 %v220, 102
          %v355 = vpop.permute.xlu0 %354
          %356 = vrot.lane.b32.xlu0 %v221, 102
          %v357 = vpop.permute.xlu0 %356
          %vm358 = vcmask 834560
          %v359 = vsel %vm358, %v351, %v353
          %v360 = vsel %vm358, %v353, %v355
          %v361 = vsel %vm358, %v355, %v357
          %365 = vrot.lane.b32.xlu0 %v222, 102
          %v366 = vpop.permute.xlu0 %365
          %367 = vrot.lane.b32.xlu0 %v223, 102
          %v368 = vpop.permute.xlu0 %367
          %369 = vrot.lane.b32.xlu0 %v224, 102
          %v370 = vpop.permute.xlu0 %369
          %371 = vrot.lane.b32.xlu0 %v225, 102
          %v372 = vpop.permute.xlu0 %371
          %v373 = vsel %vm358, %v366, %v368
          %v374 = vsel %vm358, %v368, %v370
          %v375 = vsel %vm358, %v370, %v372
          %379 = vrot.lane.b32.xlu0 %v218, 80
          %v380 = vpop.permute.xlu0 %379
          %381 = vrot.lane.b32.xlu0 %v219, 80
          %v382 = vpop.permute.xlu0 %381
          %383 = vrot.lane.b32.xlu0 %v220, 80
          %v384 = vpop.permute.xlu0 %383
          %385 = vrot.lane.b32.xlu0 %v221, 80
          %v386 = vpop.permute.xlu0 %385
          %vm387 = vcmask 654336
          %v388 = vsel %vm387, %v380, %v382
          %v389 = vsel %vm387, %v382, %v384
          %v390 = vsel %vm387, %v384, %v386
          %394 = vrot.lane.b32.xlu0 %v222, 80
          %v395 = vpop.permute.xlu0 %394
          %396 = vrot.lane.b32.xlu0 %v223, 80
          %v397 = vpop.permute.xlu0 %396
          %398 = vrot.lane.b32.xlu0 %v224, 80
          %v399 = vpop.permute.xlu0 %398
          %400 = vrot.lane.b32.xlu0 %v225, 80
          %v401 = vpop.permute.xlu0 %400
          %v402 = vsel %vm387, %v395, %v397
          %v403 = vsel %vm387, %v397, %v399
          %v404 = vsel %vm387, %v399, %v401
          %408 = vrot.lane.b32.xlu0 %v218, 79
          %v409 = vpop.permute.xlu0 %408
          %410 = vrot.lane.b32.xlu0 %v219, 79
          %v411 = vpop.permute.xlu0 %410
          %412 = vrot.lane.b32.xlu0 %v220, 79
          %v413 = vpop.permute.xlu0 %412
          %414 = vrot.lane.b32.xlu0 %v221, 79
          %v415 = vpop.permute.xlu0 %414
          %vm416 = vcmask 646144
          %v417 = vsel %vm416, %v409, %v411
          %v418 = vsel %vm416, %v411, %v413
          %v419 = vsel %vm416, %v413, %v415
          %423 = vrot.lane.b32.xlu0 %v222, 79
          %v424 = vpop.permute.xlu0 %423
          %425 = vrot.lane.b32.xlu0 %v223, 79
          %v426 = vpop.permute.xlu0 %425
          %427 = vrot.lane.b32.xlu0 %v224, 79
          %v428 = vpop.permute.xlu0 %427
          %429 = vrot.lane.b32.xlu0 %v225, 79
          %v430 = vpop.permute.xlu0 %429
          %v431 = vsel %vm416, %v424, %v426
          %v432 = vsel %vm416, %v426, %v428
          %v433 = vsel %vm416, %v428, %v430
          %437 = vrot.lane.b32.xlu0 %v218, 78
          %v438 = vpop.permute.xlu0 %437
          %439 = vrot.lane.b32.xlu0 %v219, 78
          %v440 = vpop.permute.xlu0 %439
          %441 = vrot.lane.b32.xlu0 %v220, 78
          %v442 = vpop.permute.xlu0 %441
          %443 = vrot.lane.b32.xlu0 %v221, 78
          %v444 = vpop.permute.xlu0 %443
          %vm445 = vcmask 637952
          %v446 = vsel %vm445, %v438, %v440
          %v447 = vsel %vm445, %v440, %v442
          %v448 = vsel %vm445, %v442, %v444
          %452 = vrot.lane.b32.xlu0 %v222, 78
          %v453 = vpop.permute.xlu0 %452
          %454 = vrot.lane.b32.xlu0 %v223, 78
          %v455 = vpop.permute.xlu0 %454
          %456 = vrot.lane.b32.xlu0 %v224, 78
          %v457 = vpop.permute.xlu0 %456
          %458 = vrot.lane.b32.xlu0 %v225, 78
          %v459 = vpop.permute.xlu0 %458
          %v460 = vsel %vm445, %v453, %v455
          %v461 = vsel %vm445, %v455, %v457
          %v462 = vsel %vm445, %v457, %v459
          %v466 = vld [vmem:[%s2] sm:$0xff]
          %vm467 = vcmask 588800
          %v469 = vsel %vm467, %v466, 0
          %471 = vmatprep.subr.mxu0 %v219
          %472 = vmatpush1.msra.mxu0 %v218
          %473 = vmatprep.subr.mxu0 %v240
          %474 = vmatpush1.msra.mxu0 %v239
          %475 = vmatprep.subr.mxu0 %v273
          %476 = vmatpush1.msra.mxu0 %v272
          %477 = vmatprep.subr.mxu0 %v302
          %478 = vmatpush1.msra.mxu0 %v301
          %479 = vmatprep.subr.mxu0 %v331
          %480 = vmatpush1.msra.mxu0 %v330
          %481 = vmatprep.subr.mxu0 %v360
          %482 = vmatpush1.msra.mxu0 %v359
          %483 = vmatprep.subr.mxu0 %v389
          %484 = vmatpush1.msra.mxu0 %v388
          %485 = vmatprep.subr.mxu0 %v418
          %486 = vmatpush1.msra.mxu0 %v417
          %487 = vmatprep.subr.mxu0 %v447
          %488 = vmatpush1.msra.mxu0 %v446
          %489 = vmatprep.subr.mxu0 0.0
          %490 = vmatpush1.msra.mxu0 0.0
          %491 = vmatprep.subr.mxu0 0.0
          %492 = vmatpush1.msra.mxu0 0.0
          %493 = vmatprep.subr.mxu0 0.0
          %494 = vmatpush1.msra.mxu0 0.0
          %495 = vmatprep.subr.mxu0 0.0
          %496 = vmatpush1.msra.mxu0 0.0
          %497 = vmatprep.subr.mxu0 0.0
          %498 = vmatpush1.msra.mxu0 0.0
          %499 = vmatprep.subr.mxu0 0.0
          %500 = vmatpush1.msra.mxu0 0.0
          %501 = vmatprep.subr.mxu0 0.0
          %502 = vmatpush1.msra.mxu0 0.0
          %503 = vmatprep.subr.mxu0 0.0
          %504 = vmatpush1.msra.mxu0 0.0
          %505 = vmatprep.subr.mxu0 0.0
          %506 = vmatpush1.msra.mxu0 0.0
          %507 = vmatprep.subr.mxu0 0.0
          %508 = vmatpush1.msra.mxu0 0.0
          %509 = vmatprep.subr.mxu0 0.0
          %510 = vmatpush1.msra.mxu0 0.0
          %511 = vmatprep.subr.mxu0 0.0
          %512 = vmatpush1.msra.mxu0 0.0
          %513 = vmatprep.subr.mxu0 0.0
          %514 = vmatpush1.msra.mxu0 0.0
          %515 = vmatprep.subr.mxu0 0.0
          %516 = vmatpush1.msra.mxu0 0.0
          %517 = vmatprep.subr.mxu0 0.0
          %518 = vmatpush1.msra.mxu0 0.0
          %519 = vmatprep.subr.mxu0 0.0
          %520 = vmatpush1.msra.mxu0 0.0
          %521 = vmatprep.subr.mxu0 0.0
          %522 = vmatpush1.msra.mxu0 0.0
          %523 = vmatprep.subr.mxu0 0.0
          %524 = vmatpush1.msra.mxu0 0.0
          %525 = vmatprep.subr.mxu0 0.0
          %526 = vmatpush1.msra.mxu0 0.0
          %527 = vmatprep.subr.mxu0 0.0
          %528 = vmatpush1.msra.mxu0 0.0
          %529 = vmatprep.subr.mxu0 0.0
          %530 = vmatpush1.msra.mxu0 0.0
          %531 = vmatprep.subr.mxu0 0.0
          %532 = vmatpush1.msra.mxu0 0.0
          %533 = vmatprep.subr.mxu0 0.0
          %534 = vmatpush1.msra.mxu0 0.0
          %535 = vmatprep.mubr.f32.mxu0 0.0
          %536 = vmatmul.mubr.f32.gmra.mrb[0].mxu0 %v469
          %v537 = vpop.f32.mrb[0].mxu0
          %v538 = vadd.f32 0.0, %v537
          %v539 = vpop.f32.mrb[0].mxu0
          %v540 = vadd.f32 0.0, %v539
          %541 = vdwg.mxu0
          %542 = vmatprep.subr.mxu0 %v222
          %543 = vmatpush1.msra.mxu0 %v220
          %544 = vmatprep.subr.mxu0 %v257
          %545 = vmatpush1.msra.mxu0 %v241
          %546 = vmatprep.subr.mxu0 %v286
          %547 = vmatpush1.msra.mxu0 %v274
          %548 = vmatprep.subr.mxu0 %v315
          %549 = vmatpush1.msra.mxu0 %v303
          %550 = vmatprep.subr.mxu0 %v344
          %551 = vmatpush1.msra.mxu0 %v332
          %552 = vmatprep.subr.mxu0 %v373
          %553 = vmatpush1.msra.mxu0 %v361
          %554 = vmatprep.subr.mxu0 %v402
          %555 = vmatpush1.msra.mxu0 %v390
          %556 = vmatprep.subr.mxu0 %v431
          %557 = vmatpush1.msra.mxu0 %v419
          %558 = vmatprep.subr.mxu0 %v460
          %559 = vmatpush1.msra.mxu0 %v448
          %560 = vmatprep.subr.mxu0 0.0
          %561 = vmatpush1.msra.mxu0 0.0
          %562 = vmatprep.subr.mxu0 0.0
          %563 = vmatpush1.msra.mxu0 0.0
          %564 = vmatprep.subr.mxu0 0.0
          %565 = vmatpush1.msra.mxu0 0.0
          %566 = vmatprep.subr.mxu0 0.0
          %567 = vmatpush1.msra.mxu0 0.0
          %568 = vmatprep.subr.mxu0 0.0
          %569 = vmatpush1.msra.mxu0 0.0
          %570 = vmatprep.subr.mxu0 0.0
          %571 = vmatpush1.msra.mxu0 0.0
          %572 = vmatprep.subr.mxu0 0.0
          %573 = vmatpush1.msra.mxu0 0.0
          %574 = vmatprep.subr.mxu0 0.0
          %575 = vmatpush1.msra.mxu0 0.0
          %576 = vmatprep.subr.mxu0 0.0
          %577 = vmatpush1.msra.mxu0 0.0
          %578 = vmatprep.subr.mxu0 0.0
          %579 = vmatpush1.msra.mxu0 0.0
          %580 = vmatprep.subr.mxu0 0.0
          %581 = vmatpush1.msra.mxu0 0.0
          %582 = vmatprep.subr.mxu0 0.0
          %583 = vmatpush1.msra.mxu0 0.0
          %584 = vmatprep.subr.mxu0 0.0
          %585 = vmatpush1.msra.mxu0 0.0
          %586 = vmatprep.subr.mxu0 0.0
          %587 = vmatpush1.msra.mxu0 0.0
          %588 = vmatprep.subr.mxu0 0.0
          %589 = vmatpush1.msra.mxu0 0.0
          %590 = vmatprep.subr.mxu0 0.0
          %591 = vmatpush1.msra.mxu0 0.0
          %592 = vmatprep.subr.mxu0 0.0
          %593 = vmatpush1.msra.mxu0 0.0
          %594 = vmatprep.subr.mxu0 0.0
          %595 = vmatpush1.msra.mxu0 0.0
          %596 = vmatprep.subr.mxu0 0.0
          %597 = vmatpush1.msra.mxu0 0.0
          %598 = vmatprep.subr.mxu0 0.0
          %599 = vmatpush1.msra.mxu0 0.0
          %600 = vmatprep.subr.mxu0 0.0
          %601 = vmatpush1.msra.mxu0 0.0
          %602 = vmatprep.subr.mxu0 0.0
          %603 = vmatpush1.msra.mxu0 0.0
          %604 = vmatprep.subr.mxu0 0.0
          %605 = vmatpush1.msra.mxu0 0.0
          %606 = vmatprep.mubr.f32.mxu0 0.0
          %607 = vmatmul.mubr.f32.gmra.mrb[0].mxu0 %v469
          %v608 = vpop.f32.mrb[0].mxu0
          %v609 = vadd.f32 0.0, %v608
          %v610 = vpop.f32.mrb[0].mxu0
          %v611 = vadd.f32 0.0, %v610
          %612 = vdwg.mxu0
          %613 = vmatprep.subr.mxu0 %v224
          %614 = vmatpush1.msra.mxu0 %v223
          %615 = vmatprep.subr.mxu0 %v259
          %616 = vmatpush1.msra.mxu0 %v258
          %617 = vmatprep.subr.mxu0 %v288
          %618 = vmatpush1.msra.mxu0 %v287
          %619 = vmatprep.subr.mxu0 %v317
          %620 = vmatpush1.msra.mxu0 %v316
          %621 = vmatprep.subr.mxu0 %v346
          %622 = vmatpush1.msra.mxu0 %v345
          %623 = vmatprep.subr.mxu0 %v375
          %624 = vmatpush1.msra.mxu0 %v374
          %625 = vmatprep.subr.mxu0 %v404
          %626 = vmatpush1.msra.mxu0 %v403
          %627 = vmatprep.subr.mxu0 %v433
          %628 = vmatpush1.msra.mxu0 %v432
          %629 = vmatprep.subr.mxu0 %v462
          %630 = vmatpush1.msra.mxu0 %v461
          %631 = vmatprep.subr.mxu0 0.0
          %632 = vmatpush1.msra.mxu0 0.0
          %633 = vmatprep.subr.mxu0 0.0
          %634 = vmatpush1.msra.mxu0 0.0
          %635 = vmatprep.subr.mxu0 0.0
          %636 = vmatpush1.msra.mxu0 0.0
          %637 = vmatprep.subr.mxu0 0.0
          %638 = vmatpush1.msra.mxu0 0.0
          %639 = vmatprep.subr.mxu0 0.0
          %640 = vmatpush1.msra.mxu0 0.0
          %641 = vmatprep.subr.mxu0 0.0
          %642 = vmatpush1.msra.mxu0 0.0
          %643 = vmatprep.subr.mxu0 0.0
          %644 = vmatpush1.msra.mxu0 0.0
          %645 = vmatprep.subr.mxu0 0.0
          %646 = vmatpush1.msra.mxu0 0.0
          %647 = vmatprep.subr.mxu0 0.0
          %648 = vmatpush1.msra.mxu0 0.0
          %649 = vmatprep.subr.mxu0 0.0
          %650 = vmatpush1.msra.mxu0 0.0
          %651 = vmatprep.subr.mxu0 0.0
          %652 = vmatpush1.msra.mxu0 0.0
          %653 = vmatprep.subr.mxu0 0.0
          %654 = vmatpush1.msra.mxu0 0.0
          %655 = vmatprep.subr.mxu0 0.0
          %656 = vmatpush1.msra.mxu0 0.0
          %657 = vmatprep.subr.mxu0 0.0
          %658 = vmatpush1.msra.mxu0 0.0
          %659 = vmatprep.subr.mxu0 0.0
          %660 = vmatpush1.msra.mxu0 0.0
          %661 = vmatprep.subr.mxu0 0.0
          %662 = vmatpush1.msra.mxu0 0.0
          %663 = vmatprep.subr.mxu0 0.0
          %664 = vmatpush1.msra.mxu0 0.0
          %665 = vmatprep.subr.mxu0 0.0
          %666 = vmatpush1.msra.mxu0 0.0
          %667 = vmatprep.subr.mxu0 0.0
          %668 = vmatpush1.msra.mxu0 0.0
          %669 = vmatprep.subr.mxu0 0.0
          %670 = vmatpush1.msra.mxu0 0.0
          %671 = vmatprep.subr.mxu0 0.0
          %672 = vmatpush1.msra.mxu0 0.0
          %673 = vmatprep.subr.mxu0 0.0
          %674 = vmatpush1.msra.mxu0 0.0
          %675 = vmatprep.subr.mxu0 0.0
          %676 = vmatpush1.msra.mxu0 0.0
          %677 = vmatprep.mubr.f32.mxu0 0.0
          %678 = vmatmul.mubr.f32.gmra.mrb[0].mxu0 %v469
          %v679 = vpop.f32.mrb[0].mxu0
          %v680 = vadd.f32 0.0, %v679
          %v681 = vpop.f32.mrb[0].mxu0
          %v682 = vadd.f32 0.0, %v681
          %683 = vdwg.mxu0
          %684 = vst [vmem:[#allocation3] sm:$0xff] %v538
          %685 = vst [vmem:[#allocation3 + $0x8] sm:$0xff] %v540
          %686 = vst [vmem:[#allocation3 + $0x10] sm:$0xff] %v609
          %687 = vst [vmem:[#allocation3 + $0x18] sm:$0xff] %v611
          %688 = vst [vmem:[#allocation3 + $0x20] sm:$0xff] %v680
          %689 = vst [vmem:[#allocation3 + $0x28] sm:$0xff] %v682
          %690 = vst [vmem:[#allocation4] sm:$0xff] %v330
          %691 = vst [vmem:[#allocation4 + $0x8] sm:$0xff] %v331
          %692 = vst [vmem:[#allocation4 + $0x10] sm:$0xff] %v332
          %693 = vst [vmem:[#allocation4 + $0x18] sm:$0xff] %v344
          %694 = vst [vmem:[#allocation4 + $0x20] sm:$0xff] %v345
          %695 = vst [vmem:[#allocation4 + $0x28] sm:$0xff] %v346
          %v696 = vld [vmem:[%s0] sm:$0x3f]
          %v698 = vlaneseq
          %v699 = vshrl.u32 %v698, 7
          %v700 = vsub.s32 0, %v699
          %v701 = vrot.slane %v696, %v700
          %v702 = vlaneseq
          %v703 = vshrl.u32 %v702, 7
          %v704 = vsub.s32 1, %v703
          %v705 = vrot.slane %v696, %v704
          %v706 = vlaneseq
          %v707 = vshrl.u32 %v706, 7
          %v708 = vsub.s32 2, %v707
          %v709 = vrot.slane %v696, %v708
          %v710 = vlaneseq
          %v711 = vshrl.u32 %v710, 7
          %v712 = vsub.s32 3, %v711
          %v713 = vrot.slane %v696, %v712
          %v714 = vlaneseq
          %v715 = vshrl.u32 %v714, 7
          %v716 = vsub.s32 4, %v715
          %v717 = vrot.slane %v696, %v716
          %v718 = vlaneseq
          %v719 = vshrl.u32 %v718, 7
          %v720 = vsub.s32 5, %v719
          %v721 = vrot.slane %v696, %v720
          %v728 = vmul.f32 %v538, %v701
          %v729 = vmul.f32 %v540, %v705
          %v730 = vmul.f32 %v609, %v709
          %v731 = vmul.f32 %v611, %v713
          %v732 = vmul.f32 %v680, %v717
          %v733 = vmul.f32 %v682, %v721
          %v734 = vld [vmem:[#allocation2] sm:$0xff]
          %v735 = vadd.f32 %v728, %v729
          %v736 = vadd.f32 %v735, %v730
          %v737 = vadd.f32 %v736, %v731
          %v738 = vadd.f32 %v737, %v732
          %v739 = vadd.f32 %v738, %v733
          %740 = vadd.xlane.f32.xlu0 %v739
          %v741 = vpop.xlane.xlu0 %740
          %v742 = vmul.f32 %v728, %v538
          %v743 = vmul.f32 %v729, %v540
          %v744 = vmul.f32 %v730, %v609
          %v745 = vmul.f32 %v731, %v611
          %v746 = vmul.f32 %v732, %v680
          %v747 = vmul.f32 %v733, %v682
          %v748 = vadd.f32 %v742, %v743
          %v749 = vadd.f32 %v748, %v744
          %v750 = vadd.f32 %v749, %v745
          %v751 = vadd.f32 %v750, %v746
          %v752 = vadd.f32 %v751, %v747
          %753 = vadd.xlane.f32.xlu0 %v752
          %v754 = vpop.xlane.xlu0 %753
          %v755 = vadd.f32 %v330, %v331
          %v756 = vadd.f32 %v755, %v332
          %v757 = vadd.f32 %v756, %v344
          %v758 = vadd.f32 %v757, %v345
          %v759 = vadd.f32 %v758, %v346
          %760 = vadd.xlane.f32.xlu0 %v759
          %v761 = vpop.xlane.xlu0 %760
          %v762 = vmul.f32 %v330, %v330
          %v763 = vmul.f32 %v331, %v331
          %v764 = vmul.f32 %v332, %v332
          %v765 = vmul.f32 %v344, %v344
          %v766 = vmul.f32 %v345, %v345
          %v767 = vmul.f32 %v346, %v346
          %v768 = vadd.f32 %v762, %v763
          %v769 = vadd.f32 %v768, %v764
          %v770 = vadd.f32 %v769, %v765
          %v771 = vadd.f32 %v770, %v766
          %v772 = vadd.f32 %v771, %v767
          %773 = vadd.xlane.f32.xlu0 %v772
          %v774 = vpop.xlane.xlu0 %773
          %vm775 = vcmask 7168
          %v776 = vsel %vm775, %v741, %v754
          %vm777 = vcmask 15360
          %v778 = vsel %vm777, %v776, %v761
          %vm779 = vcmask 23552
          %v780 = vsel %vm779, %v778, %v774
          %v781 = vadd.f32 %v734, %v780
          %vm782 = vcmask 31744
          %783 = vst.msk [vmem:[#allocation2] sm:$0xff] %vm782, %v781
        $region48: #{tpu_custom_call.1} parent=35 // pred_fallthru
          _
        %p784 = scmp.eq.s32.totalorder %s23, 1
        // Predicated region
        $region49: #{tpu_custom_call.1} parent=35 // pred_check
          %p785 = pneg %p784
        $region50: #{tpu_custom_call.1} parent=35 // pred_check_branch
          %787 = sbr.rel (%p785) target = $region52
        $region51: #{tpu_custom_call.1} parent=35 // pred_region
          %v788 = vld [vmem:[#allocation3] sm:$0xff]
          %v789 = vld [vmem:[#allocation3 + $0x8] sm:$0xff]
          %v790 = vld [vmem:[#allocation3 + $0x10] sm:$0xff]
          %v791 = vld [vmem:[#allocation3 + $0x18] sm:$0xff]
          %v792 = vld [vmem:[#allocation3 + $0x20] sm:$0xff]
          %v793 = vld [vmem:[#allocation3 + $0x28] sm:$0xff]
          %v794 = vld [vmem:[#allocation4] sm:$0xff]
          %v795 = vld [vmem:[#allocation4 + $0x8] sm:$0xff]
          %v796 = vld [vmem:[#allocation4 + $0x10] sm:$0xff]
          %v797 = vld [vmem:[#allocation4 + $0x18] sm:$0xff]
          %v798 = vld [vmem:[#allocation4 + $0x20] sm:$0xff]
          %v799 = vld [vmem:[#allocation4 + $0x28] sm:$0xff]
          %v800 = vld [vmem:[#allocation2] sm:$0xff]
          %v801 = vmul.f32 %v800, 0.001953125
          %v802 = vmul.f32 %v801, %v801
          %804 = vrot.lane.b32.xlu0 %v802, 1
          %v805 = vpop.permute.xlu0 %804
          %v807 = vsub.f32 %v801, %v805
          %v808 = vld [vmem:[%s3] sm:$0xff]
          %v809 = vadd.f32 %v807, 1e-05
          %v810 = vrsqrt.pop %v809
          %812 = vrot.lane.b32.xlu0 %v810, 127
          %v813 = vpop.permute.xlu0 %812
          %v815 = vmul.f32 %v808, %v813
          %v816 = vmul.f32 %v815, 0.70710677
          %v817 = vmul.f32 %v808, 0.70710677
          %v818 = vmul.f32 %v801, %v816
          %820 = vrot.lane.b32.xlu0 %v818, 1
          %v821 = vpop.permute.xlu0 %820
          %v823 = vsub.f32 %v817, %v821
          %825 = vset.pattern.permute.xlu0 0
          %826 = vperm.xlu0 %825, %v816
          %v827 = vpop.permute.xlu0 %826
          %v829 = vmul.f32 %v788, %v827
          %v830 = vmul.f32 %v789, %v827
          %v831 = vmul.f32 %v790, %v827
          %v832 = vmul.f32 %v791, %v827
          %v833 = vmul.f32 %v792, %v827
          %v834 = vmul.f32 %v793, %v827
          %835 = vset.pattern.permute.xlu0 2
          %836 = vperm.xlu0 %835, %v816
          %v837 = vpop.permute.xlu0 %836
          %v839 = vmul.f32 %v794, %v837
          %v840 = vmul.f32 %v795, %v837
          %v841 = vmul.f32 %v796, %v837
          %v842 = vmul.f32 %v797, %v837
          %v843 = vmul.f32 %v798, %v837
          %v844 = vmul.f32 %v799, %v837
          %v845 = vadd.f32 %v829, %v839
          %v846 = vadd.f32 %v830, %v840
          %v847 = vadd.f32 %v831, %v841
          %v848 = vadd.f32 %v832, %v842
          %v849 = vadd.f32 %v833, %v843
          %v850 = vadd.f32 %v834, %v844
          %852 = vrot.lane.b32.xlu0 %v823, 126
          %v853 = vpop.permute.xlu0 %852
          %v855 = vadd.f32 %v823, %v853
          %857 = vset.pattern.permute.xlu0 1
          %858 = vperm.xlu0 %857, %v855
          %v859 = vpop.permute.xlu0 %858
          %v861 = vadd.f32 %v845, %v859
          %v862 = vadd.f32 %v846, %v859
          %v863 = vadd.f32 %v847, %v859
          %v864 = vadd.f32 %v848, %v859
          %v865 = vadd.f32 %v849, %v859
          %v866 = vadd.f32 %v850, %v859
          %v867 = vmax.f32 %v861, 0.0
          %v868 = vmax.f32 %v862, 0.0
          %v869 = vmax.f32 %v863, 0.0
          %v870 = vmax.f32 %v864, 0.0
          %v871 = vmax.f32 %v865, 0.0
          %v872 = vmax.f32 %v866, 0.0
          %873 = vst [vmem:[%s204] sm:$0xff] %v867
          %874 = vst [vmem:[%s204 + $0x8] sm:$0xff] %v868
          %875 = vst [vmem:[%s204 + $0x10] sm:$0xff] %v869
          %s876 = scalar_lea.vmem %s204, 24 [#allocation8]
          %877 = vst [vmem:[%s876] sm:$0xff] %v870
          %878 = vst [vmem:[%s876 + $0x8] sm:$0xff] %v871
          %879 = vst [vmem:[%s876 + $0x10] sm:$0xff] %v872
        $region52: #{tpu_custom_call.1} parent=35 // pred_fallthru
          _
        %s880 = sand.u32 %s125, 1
        %s881 = scalar_lea.sflag [#allocation7], %s880
        %s882 = sand.u32 %s125, 1
        %s883 = smul.addr %s882, 48
        %s884 = scalar_lea.vmem [#allocation8], %s883
        // Predicated region
        $region53: #{tpu_custom_call.1} parent=35 // pred_check
          %p885 = pneg %p135
        $region54: #{tpu_custom_call.1} parent=35 // pred_check_branch
          %887 = sbr.rel (%p885) target = $region56
        $region55: #{tpu_custom_call.1} parent=35 // pred_region
          %s888 = smul.u32 %s23, %s24
          %s889 = smul.u32 2, %s888
          %s891 = ssub.s32 768, 768
          %892 = vsyncadd %s881, %s891
          %s893 = smul.addr %s889, 3
          %s894 = smul.addr %s893, 128
          %s895 = scalar_lea.hbm %s4, %s894
          %s896 = sshll.u32 %s884, 4
          %s897 = int_to_ptr.vmem [resolvable:$true] %s896
          %902 = dma.vmem_to_hbm [thread:$0]  %s897, 768, %s895, %s881, 384, 384, 24
        $region56: #{tpu_custom_call.1} parent=35 // pred_fallthru
          _
      $region36: #{tpu_custom_call.1} parent=5 // pred_fallthru
        _
      %p903 = scmp.le.s32.totalorder 2, %s14
      // Predicated region
      $region57: #{tpu_custom_call.1} parent=5 // pred_check
        %p904 = pneg %p903
      $region58: #{tpu_custom_call.1} parent=5 // pred_check_branch
        %906 = sbr.rel (%p904) target = $region60
      $region59: #{tpu_custom_call.1} parent=5 // pred_region
        %s907 = ssub.s32 %s14, 2
        // Predicated region
        $region61: #{tpu_custom_call.1} parent=59 // pred_check
          %p908 = pneg %p141
        $region62: #{tpu_custom_call.1} parent=59 // pred_check_branch
          %910 = sbr.rel (%p908) target = $region64
        $region63: #{tpu_custom_call.1} parent=59 // pred_region
          %s911 = sand.u32 %s126, 1
          %s912 = scalar_lea.sflag [#allocation7], %s911
          %s913 = sand.u32 %s126, 1
          %s914 = smul.addr %s913, 48
          %s915 = scalar_lea.vmem [#allocation8], %s914
          %916 = dma.done %s912, 768
        $region64: #{tpu_custom_call.1} parent=59 // pred_fallthru
          _
      $region60: #{tpu_custom_call.1} parent=5 // pred_fallthru
        _
    $region6: #{tpu_custom_call.1} parent=1 // loop_footer
      %s18 = sadd.s32 1, %s14
    $region7: #{tpu_custom_call.1} parent=1 // loop_footer_branch
      %13 = sbr.rel target = $region3
    $region8: #{tpu_custom_call.1} parent=1 // loop_exit
      _
    %917 = vsyncpa [#allocation6], 1
    %s918 = scalar_lea.sflag [#allocation6], 1
    %919 = vsyncpa %s918, 1
    %920 = vsyncpa [#allocation7], 1
    %s921 = scalar_lea.sflag [#allocation7], 1
    %922 = vsyncpa %s921, 1

</llo_original>
